<compile_context>
chip_gen: v7x
topology: tpu7x:2x2x1
jax: 0.10.0
libtpu: 0.0.40
codegen_flags: <defaults>
</compile_context>

<pallas_src>
import functools

import jax
import jax.numpy as jnp
import numpy as np
from jax import lax
from jax.experimental import pallas as pl
from jax.experimental.pallas import tpu as pltpu


def _disentangle_kernel(sk_ref, hidden_ref, mask_ref, int_emb_ref, en_ref,
                        out_ref, *, t, bt, n):
    """One grid step handles `bt` batches (node axis flattened into sublanes).

    sk_ref      : SMEM (B_padded,) int32   -- floor(e * node_num) per batch
    hidden_ref  : VMEM (bt*n, D)           -- hidden, batch/node flattened
    mask_ref    : VMEM (bt*n, 1)           -- node mask column
    int_emb_ref : VMEM (K, D)              -- intention embeddings (resident)
    en_ref      : VMEM (1, K)              -- precomputed ||int_emb|| (resident)
    out_ref     : VMEM (bt*n, K)           -- int_H block
    """
    ie = int_emb_ref[...]                              # (K, D)
    en = en_ref[...]                                   # (1, K)
    h_all = hidden_ref[...]                            # (bt*n, D)
    mask_all = mask_ref[...]                           # (bt*n, 1)

    k_fac = ie.shape[0]
    del k_fac  # shape bookkeeping only

    # --- cosine similarity for the whole block in one MXU pass ---------------
    # NOTE: precision stays HIGHEST so float-equality tie-breaking below
    # matches the reference bit-for-bit (see review: lowering precision can
    # flip sm == sn ties).
    dots = lax.dot_general(h_all, ie, (((1,), (1,)), ((), ())),
                           precision=lax.Precision.HIGHEST,
                           preferred_element_type=jnp.float32)       # (bt*n, K)
    hn = jnp.sqrt(jnp.sum(h_all * h_all, axis=-1, keepdims=True))    # (bt*n, 1)
    # torch.nn.CosineSimilarity eps: clamp the *product* of norms at 1e-8.
    cos = dots / jnp.maximum(hn * en, 1e-8)                          # (bt*n, K)
    sim = t * cos * mask_all                                         # (bt*n, K)

    # --- stable descending rank along N (pairwise compares) ------------------
    # Tie-break mask depends only on node indices: build it once, 2D + bcast K.
    m_idx = lax.broadcasted_iota(jnp.int32, (n, n, 1), 1)   # index of "other" node m
    n_idx = lax.broadcasted_iota(jnp.int32, (n, n, 1), 0)   # index of node n
    tie = m_idx < n_idx                                     # (n, n, 1) bool

    base = pl.program_id(0) * bt
    for i in range(bt):                 # bt is small & static; trivial unroll
        sim_b = sim[i * n:(i + 1) * n, :]                   # (n, K)
        sm = sim_b[jnp.newaxis, :, :]                       # (1, n, K) value of node m
        sn = sim_b[:, jnp.newaxis, :]                       # (n, 1, K) value of node n
        keep = jnp.logical_or(sm > sn, jnp.logical_and(sm == sn, tie))
        rank = jnp.sum(keep.astype(jnp.float32), axis=1)    # (n, K), stable desc rank
        sk = sk_ref[base + i].astype(jnp.float32)           # scalar from SMEM
        int_h = jnp.where(rank <= sk, 3.0, 0.0)             # (n, K)
        out_ref[i * n:(i + 1) * n, :] = int_h.astype(out_ref.dtype)


def _choose_bt(batch, n, requested=None):
    if requested is not None:
        bt = max(1, min(int(requested), batch))
    else:
        # Amortize per-step overhead, but keep >=2 grid steps when B >= 2 so a
        # "parallel" batch axis can feed both v7x TensorCores.
        bt = max(1, min(8, -(-batch // 2)))
    # Block's second-minor dim (bt*n) must be a multiple of 8 unless the block
    # covers the whole flattened batch*node axis.
    if (bt * n) % 8 != 0:
        bt = batch
    return bt


def disentangle_graph(hidden, H, int_emb, mask, *, e=0.3, t=10.0, bt=None):
    """JAX/Pallas forward of DisentangleGraph. Returns (B, N, K + num_edge)."""
    B, N, D = hidden.shape
    K = int_emb.shape[0]

    hidden_f = hidden.astype(jnp.float32)
    int_emb_f = int_emb.astype(jnp.float32)
    mask_f = mask.astype(jnp.float32)
    H_f = H.astype(jnp.float32)

    # Host-side (grid-invariant / per-batch scalar) precomputation.
    en = jnp.linalg.norm(int_emb_f, axis=-1)[None, :]                 # (1, K)
    node_num = jnp.sum(mask_f, axis=1)                                # (B,)
    select_k = jnp.floor(e * node_num).astype(jnp.int32)              # (B,) int32
    mask_col = mask_f[..., None]                                      # (B, N, 1)

    bt = _choose_bt(B, N, bt)
    Bp = ((B + bt - 1) // bt) * bt
    if Bp != B:
        pad = Bp - B
        hidden_f = jnp.pad(hidden_f, ((0, pad), (0, 0), (0, 0)))
        mask_col = jnp.pad(mask_col, ((0, pad), (0, 0), (0, 0)))
        select_k = jnp.pad(select_k, ((0, pad),))

    hidden_flat = hidden_f.reshape(Bp * N, D)
    mask_flat = mask_col.reshape(Bp * N, 1)

    kernel = functools.partial(_disentangle_kernel, t=float(t), bt=bt, n=N)

    # NOTE(v7x): if N or K are scaled up, the per-batch (N, N, K) ranking
    # intermediate is what caps the tile on 64 MiB VMEM; lower `bt` and/or set
    # pltpu.CompilerParams(vmem_limit_bytes=...) accordingly.
    grid_spec = pltpu.PrefetchScalarGridSpec(
        num_scalar_prefetch=1,                      # select_k -> SMEM
        grid=(Bp // bt,),
        in_specs=[
            pl.BlockSpec((bt * N, D), lambda b, sk: (b, 0)),   # hidden
            pl.BlockSpec((bt * N, 1), lambda b, sk: (b, 0)),   # mask
            pl.BlockSpec((K, D), lambda b, sk: (0, 0)),        # int_emb (resident)
            pl.BlockSpec((1, K), lambda b, sk: (0, 0)),        # ||int_emb|| (resident)
        ],
        out_specs=pl.BlockSpec((bt * N, K), lambda b, sk: (b, 0)),
    )

    int_H_flat = pl.pallas_call(
        kernel,
        out_shape=jax.ShapeDtypeStruct((Bp * N, K), jnp.float32),
        grid_spec=grid_spec,
        compiler_params=pltpu.CompilerParams(
            dimension_semantics=("parallel",)),
    )(select_k, hidden_flat, mask_flat, int_emb_f, en)

    int_H = int_H_flat.reshape(Bp, N, K)[:B]
    # H is a pure passthrough: concat in the wrapper (XLA), not in the kernel.
    return jnp.concatenate([int_H, H_f], axis=-1)


def disentangle_reference(hidden, H, int_emb, mask, e, t):
    """Pure-JAX mirror of the PyTorch forward (stable sort for tie-break)."""
    node_num = jnp.sum(mask, axis=1, keepdims=True)[..., None]        # (B,1,1)
    select_k = jnp.floor(e * node_num)
    maskf = mask.astype(jnp.float32)[..., None]                       # (B,N,1)
    dots = jnp.einsum('bnd,kd->bnk', hidden, int_emb, precision='highest')
    hn = jnp.linalg.norm(hidden, axis=-1, keepdims=True)              # (B,N,1)
    en = jnp.linalg.norm(int_emb, axis=-1)[None, None, :]             # (1,1,K)
    cos = dots / jnp.maximum(hn * en, 1e-8)
    sim = t * cos * maskf
    indices = jnp.argsort(-sim, axis=1)        # descending, stable
    idx = jnp.argsort(indices, axis=1)
    judge = idx.astype(jnp.float32) - select_k
    int_H = jnp.where(judge <= 0.0, 3.0, 0.0)
    return jnp.concatenate([int_H, H.astype(jnp.float32)], axis=-1)


if __name__ == "__main__":
    B, N, D, K, E = 2, 8, 32, 4, 6      # batch, nodes, dim, num_factor, num_edge
    alpha, e_frac, temp = 0.2, 0.3, 10.0

    key = jax.random.PRNGKey(0)
    k1, k2, k3, k4, k5, k6 = jax.random.split(key, 6)
    hidden = jax.random.normal(k1, (B, N, D), dtype=jnp.float32)
    H = (jax.random.uniform(k2, (B, N, E)) < 0.5).astype(jnp.float32)
    int_emb = jax.random.normal(k3, (K, D), dtype=jnp.float32)
    mask = (jax.random.uniform(k4, (B, N)) < 0.8).astype(jnp.float32)

    # Parameters from __init__ (w, w1, LeakyReLU(alpha)) are unused in forward;
    # created only for module-shape fidelity.
    w = jax.random.normal(k5, (D, D), dtype=jnp.float32)
    w1 = jax.random.normal(k6, (D, 1), dtype=jnp.float32)

    out = jax.block_until_ready(
        disentangle_graph(hidden, H, int_emb, mask, e=e_frac, t=temp))

    ref = disentangle_reference(hidden, H, int_emb, mask, e_frac, temp)
    np.testing.assert_allclose(np.asarray(out), np.asarray(ref),
                               rtol=1e-5, atol=1e-5)
    assert out.shape == (B, N, K + E)
    print("KERNEL_OK")
</pallas_src>

<mosaic_0001>
module attributes {stable_mosaic.version = 11 : i64} {
  func.func @_disentangle_kernel(%arg0: i32, %arg1: memref<2xi32, #tpu.memory_space<smem>>, %arg2: memref<8x32xf32, #tpu.memory_space<vmem>>, %arg3: memref<8x1xf32, #tpu.memory_space<vmem>>, %arg4: memref<4x32xf32, #tpu.memory_space<vmem>>, %arg5: memref<1x4xf32, #tpu.memory_space<vmem>>, %arg6: memref<8x4xf32, #tpu.memory_space<vmem>>) attributes {dimension_semantics = [#tpu.dimension_semantics<parallel>], iteration_bounds = array<i64: 2>, scalar_prefetch = 1 : i64, scratch_operands = 0 : i64, tpu.core_type = #tpu.core_type<tc>, window_params = [{transform_indices = @transform_0, window_bounds = array<i64: 8, 32>}, {transform_indices = @transform_1, window_bounds = array<i64: 8, 1>}, {pipeline_mode = #tpu.pipeline_mode<synchronous>, transform_indices = @transform_2, window_bounds = array<i64: 4, 32>}, {pipeline_mode = #tpu.pipeline_mode<synchronous>, transform_indices = @transform_3, window_bounds = array<i64: 1, 4>}, {transform_indices = @transform_4, window_bounds = array<i64: 8, 4>}]} {
    %c0 = arith.constant 0 : index
    %c0_0 = arith.constant 0 : index
    %0 = vector.load %arg4[%c0, %c0_0] : memref<4x32xf32, #tpu.memory_space<vmem>>, vector<4x32xf32>
    %c0_1 = arith.constant 0 : index
    %c0_2 = arith.constant 0 : index
    %1 = vector.load %arg5[%c0_1, %c0_2] : memref<1x4xf32, #tpu.memory_space<vmem>>, vector<1x4xf32>
    %c0_3 = arith.constant 0 : index
    %c0_4 = arith.constant 0 : index
    %2 = vector.load %arg2[%c0_3, %c0_4] : memref<8x32xf32, #tpu.memory_space<vmem>>, vector<8x32xf32>
    %c0_5 = arith.constant 0 : index
    %c0_6 = arith.constant 0 : index
    %3 = vector.load %arg3[%c0_5, %c0_6] : memref<8x1xf32, #tpu.memory_space<vmem>>, vector<8x1xf32>
    %cst = arith.constant dense<0.000000e+00> : vector<8x4xf32>
    %4 = tpu.matmul %2, %0, %cst {dimension_numbers = #tpu.dot_dimension_numbers<[1], [1], [0], [0], [0, 0, 1, 0], [], []>, precision = #tpu.contract_precision<fp32>} : vector<8x32xf32>, vector<4x32xf32>, vector<8x4xf32> -> vector<8x4xf32>
    %5 = arith.mulf %2, %2 : vector<8x32xf32>
    %cst_7 = arith.constant dense<0.000000e+00> : vector<8xf32>
    %6 = vector.multi_reduction <add>, %5, %cst_7 [1] : vector<8x32xf32> to vector<8xf32>
    %7 = vector.shape_cast %6 : vector<8xf32> to vector<8x1xf32>
    %8 = math.sqrt %7 : vector<8x1xf32>
    %9 = vector.broadcast %8 : vector<8x1xf32> to vector<8x4xf32>
    %10 = vector.broadcast %1 : vector<1x4xf32> to vector<8x4xf32>
    %11 = arith.mulf %9, %10 : vector<8x4xf32>
    %cst_8 = arith.constant 9.99999993E-9 : f32
    %12 = vector.broadcast %cst_8 : f32 to vector<8x4xf32>
    %13 = arith.maximumf %11, %12 : vector<8x4xf32>
    %14 = arith.divf %4, %13 : vector<8x4xf32>
    %cst_9 = arith.constant 1.000000e+01 : f32
    %15 = vector.broadcast %cst_9 : f32 to vector<8x4xf32>
    %16 = arith.mulf %15, %14 : vector<8x4xf32>
    %17 = vector.broadcast %3 : vector<8x1xf32> to vector<8x4xf32>
    %18 = arith.mulf %16, %17 : vector<8x4xf32>
    %19 = tpu.iota {dimensions = array<i32: 1>} : vector<8x8x1xi32>
    %20 = tpu.iota {dimensions = array<i32: 0>} : vector<8x8x1xi32>
    %21 = arith.cmpi slt, %19, %20 : vector<8x8x1xi32>
    %c1_i32 = arith.constant 1 : i32
    %22 = arith.muli %arg0, %c1_i32 : i32
    %23 = vector.shape_cast %18 : vector<8x4xf32> to vector<1x8x4xf32>
    %24 = vector.shape_cast %18 : vector<8x4xf32> to vector<8x1x4xf32>
    %25 = vector.broadcast %23 : vector<1x8x4xf32> to vector<8x8x4xf32>
    %26 = vector.broadcast %24 : vector<8x1x4xf32> to vector<8x8x4xf32>
    %27 = arith.cmpf ogt, %25, %26 : vector<8x8x4xf32>
    %28 = vector.broadcast %23 : vector<1x8x4xf32> to vector<8x8x4xf32>
    %29 = vector.broadcast %24 : vector<8x1x4xf32> to vector<8x8x4xf32>
    %30 = arith.cmpf oeq, %28, %29 : vector<8x8x4xf32>
    %31 = vector.broadcast %21 : vector<8x8x1xi1> to vector<8x8x4xi1>
    %32 = arith.andi %30, %31 : vector<8x8x4xi1>
    %33 = arith.ori %27, %32 : vector<8x8x4xi1>
    %34 = arith.extui %33 : vector<8x8x4xi1> to vector<8x8x4xi32>
    %35 = arith.sitofp %34 : vector<8x8x4xi32> to vector<8x8x4xf32>
    %cst_10 = arith.constant dense<0.000000e+00> : vector<8x4xf32>
    %36 = vector.multi_reduction <add>, %35, %cst_10 [1] : vector<8x8x4xf32> to vector<8x4xf32>
    %c0_i32 = arith.constant 0 : i32
    %37 = arith.addi %22, %c0_i32 : i32
    %38 = arith.index_cast %37 : i32 to index
    %39 = memref.load %arg1[%38] : memref<2xi32, #tpu.memory_space<smem>>
    %40 = arith.sitofp %39 : i32 to f32
    %41 = vector.broadcast %40 : f32 to vector<8x4xf32>
    %42 = arith.cmpf ole, %36, %41 : vector<8x4xf32>
    %cst_11 = arith.constant 3.000000e+00 : f32
    %cst_12 = arith.constant 0.000000e+00 : f32
    %43 = vector.broadcast %cst_11 : f32 to vector<8x4xf32>
    %44 = vector.broadcast %cst_12 : f32 to vector<8x4xf32>
    %45 = arith.select %42, %43, %44 : vector<8x4xi1>, vector<8x4xf32>
    %c0_13 = arith.constant 0 : index
    %c0_14 = arith.constant 0 : index
    %46 = vector.load %arg6[%c0_13, %c0_14] : memref<8x4xf32, #tpu.memory_space<vmem>>, vector<8x4xf32>
    tpu.vector_store %arg6[%c0_13, %c0_14], %45 {strides = array<i32>} : memref<8x4xf32, #tpu.memory_space<vmem>>, vector<8x4xf32>,
    return
  }
  func.func @transform_0(%arg0: i32, %arg1: memref<2xi32, #tpu.memory_space<smem>>) -> (i32, i32) {
    %c0_i32 = arith.constant 0 : i32
    %c0_i32_0 = arith.constant 0 : i32
    return %arg0, %c0_i32 : i32, i32
  }
  func.func @transform_1(%arg0: i32, %arg1: memref<2xi32, #tpu.memory_space<smem>>) -> (i32, i32) {
    %c0_i32 = arith.constant 0 : i32
    %c0_i32_0 = arith.constant 0 : i32
    return %arg0, %c0_i32 : i32, i32
  }
  func.func @transform_2(%arg0: i32, %arg1: memref<2xi32, #tpu.memory_space<smem>>) -> (i32, i32) {
    %c0_i32 = arith.constant 0 : i32
    %c0_i32_0 = arith.constant 0 : i32
    %c0_i32_1 = arith.constant 0 : i32
    return %c0_i32, %c0_i32_0 : i32, i32
  }
  func.func @transform_3(%arg0: i32, %arg1: memref<2xi32, #tpu.memory_space<smem>>) -> (i32, i32) {
    %c0_i32 = arith.constant 0 : i32
    %c0_i32_0 = arith.constant 0 : i32
    %c0_i32_1 = arith.constant 0 : i32
    return %c0_i32, %c0_i32_0 : i32, i32
  }
  func.func @transform_4(%arg0: i32, %arg1: memref<2xi32, #tpu.memory_space<smem>>) -> (i32, i32) {
    %c0_i32 = arith.constant 0 : i32
    %c0_i32_0 = arith.constant 0 : i32
    return %arg0, %c0_i32 : i32, i32
  }
}

</mosaic_0001>

<llo_original>
// kernel: tpu_custom_call.1
$region0: #{tpu_custom_call.1}
  #allocation0 [shape = 'u32[]', space=smem, size = 0x4, offset = 0x4, fixed_abs, tag = 'smem constant byte address 0x4 - core index']
  #allocation1 [shape = 'u32[144,128]{1,0:T(1,128)}', space=vmem, size = 0x12000, scoped, tag = 'internal scratch']
  #allocation2 [shape = 's32[1]{0}', space=sflag, size = 0x4, scoped, tag = 'scoped memory for tpu_custom_call.1']
  #allocation3 [shape = 'u8[512]{0}', space=smem, size = 0x200, scoped, tag = 'prefetched SMEM operand 0']
  %s0 = inlined_call_operand.hbm [shape: s32[2], index: 0, kind: input, shape index: {}]
  %s1 = inlined_call_operand.vmem [shape: f32[16,32], index: 1, kind: input, shape index: {}]
  %s2 = inlined_call_operand.vmem [shape: f32[16,1], index: 2, kind: input, shape index: {}]
  %s3 = inlined_call_operand.vmem [shape: f32[4,32], index: 3, kind: input, shape index: {}]
  %s4 = inlined_call_operand.vmem [shape: f32[1,4], index: 4, kind: input, shape index: {}]
  %s5 = inlined_call_operand.vmem [shape: f32[16,4], index: 5, kind: output, shape index: {}]
  %s6 = sld [smem:[#allocation0]]
  $region49: #{tpu_custom_call.1} parent=0
    _
  %s8 = ssub.s32 1, %s6
  %s9 = scalar_select 0, %s8, %s6
  %11 = dma.hbm_to_smem %s0, 16, [#allocation3], [#allocation2]
  %12 = dma.done [#allocation2], 16
  %13 = sfence
  loop: start=0, step=1, limit=4
  $region2: #{tpu_custom_call.1} parent=0 // loop_pre_header
    _
  $region3: #{tpu_custom_call.1} parent=0 // loop_header
    %s15 = sphi 0, %s19
    %p16 = scmp.ge.s32.totalorder %s15, 4
    %s25 = sphi 0, %s27
    %s28 = sphi 0, %s25
    %s29 = sphi 0, %s28
    %s45 = sphi 0, %s29
    %s51 = sphi 0, %s53
    %s54 = sphi 0, %s51
    %s55 = sphi 0, %s54
    %s71 = sphi 0, %s55
    %s75 = sphi 0, %s75
    %s77 = sphi 0, %s75
    %s78 = sphi 0, %s77
    %s92 = sphi 0, %s78
    %s96 = sphi 0, %s96
    %s98 = sphi 0, %s96
    %s99 = sphi 0, %s98
    %s113 = sphi 0, %s99
    %s119 = sphi 0, %s121
    %s122 = sphi 0, %s119
    %s123 = sphi 0, %s122
    %s139 = sphi 0, %s123
  $region4: #{tpu_custom_call.1} parent=0 // loop_header_branch
    %18 = sbr.rel (%p16) target = $region8
  $region5: #{tpu_custom_call.1} parent=0 // loop_body
    %s20 = ssub.s32 %s15, 1
    %s21 = ssub.s32 %s15, 2
    %s22 = sadd.s32 %s15, 1
    %s23 = ssub.s32 %s15, %s22
    %p24 = scmp.eq.s32.totalorder %s23, 0
    %s26 = sadd.s32 %s25, 1
    %s27 = scalar_select %p24, %s25, %s26
    %p30 = pneg %p24
    %p31 = scmp.eq.s32.totalorder %s15, 1
    %p32 = por %p30, %p31
    %p33 = scmp.ne.s32.totalorder %s25, %s28
    %p34 = scmp.eq.s32.totalorder %s15, 0
    %p35 = por %p33, %p34
    %p36 = scmp.ne.s32.totalorder %s25, %s28
    %p37 = scmp.eq.s32.totalorder %s20, 1
    %p38 = por %p36, %p37
    %p39 = scmp.ne.s32.totalorder %s28, %s29
    %p40 = scmp.eq.s32.totalorder %s20, 0
    %p41 = por %p39, %p40
    %p42 = scmp.ne.s32.totalorder %s28, %s29
    %p43 = scmp.eq.s32.totalorder %s21, 1
    %p44 = por %p42, %p43
    %p46 = scmp.ne.s32.totalorder %s29, %s45
    %p47 = scmp.eq.s32.totalorder %s21, 0
    %p48 = por %p46, %p47
    %s49 = ssub.s32 %s15, %s22
    %p50 = scmp.eq.s32.totalorder %s49, 0
    %s52 = sadd.s32 %s51, 1
    %s53 = scalar_select %p50, %s51, %s52
    %p56 = pneg %p50
    %p57 = scmp.eq.s32.totalorder %s15, 1
    %p58 = por %p56, %p57
    %p59 = scmp.ne.s32.totalorder %s51, %s54
    %p60 = scmp.eq.s32.totalorder %s15, 0
    %p61 = por %p59, %p60
    %p62 = scmp.ne.s32.totalorder %s51, %s54
    %p63 = scmp.eq.s32.totalorder %s20, 1
    %p64 = por %p62, %p63
    %p65 = scmp.ne.s32.totalorder %s54, %s55
    %p66 = scmp.eq.s32.totalorder %s20, 0
    %p67 = por %p65, %p66
    %p68 = scmp.ne.s32.totalorder %s54, %s55
    %p69 = scmp.eq.s32.totalorder %s21, 1
    %p70 = por %p68, %p69
    %p72 = scmp.ne.s32.totalorder %s55, %s71
    %p73 = scmp.eq.s32.totalorder %s21, 0
    %p74 = por %p72, %p73
    %s76 = sadd.s32 %s75, 1
    %p79 = scmp.eq.s32.totalorder %s15, 1
    %p80 = scmp.ne.s32.totalorder %s75, %s77
    %p81 = scmp.eq.s32.totalorder %s15, 0
    %p82 = por %p80, %p81
    %p83 = scmp.ne.s32.totalorder %s75, %s77
    %p84 = scmp.eq.s32.totalorder %s20, 1
    %p85 = por %p83, %p84
    %p86 = scmp.ne.s32.totalorder %s77, %s78
    %p87 = scmp.eq.s32.totalorder %s20, 0
    %p88 = por %p86, %p87
    %p89 = scmp.ne.s32.totalorder %s77, %s78
    %p90 = scmp.eq.s32.totalorder %s21, 1
    %p91 = por %p89, %p90
    %p93 = scmp.ne.s32.totalorder %s78, %s92
    %p94 = scmp.eq.s32.totalorder %s21, 0
    %p95 = por %p93, %p94
    %s97 = sadd.s32 %s96, 1
    %p100 = scmp.eq.s32.totalorder %s15, 1
    %p101 = scmp.ne.s32.totalorder %s96, %s98
    %p102 = scmp.eq.s32.totalorder %s15, 0
    %p103 = por %p101, %p102
    %p104 = scmp.ne.s32.totalorder %s96, %s98
    %p105 = scmp.eq.s32.totalorder %s20, 1
    %p106 = por %p104, %p105
    %p107 = scmp.ne.s32.totalorder %s98, %s99
    %p108 = scmp.eq.s32.totalorder %s20, 0
    %p109 = por %p107, %p108
    %p110 = scmp.ne.s32.totalorder %s98, %s99
    %p111 = scmp.eq.s32.totalorder %s21, 1
    %p112 = por %p110, %p111
    %p114 = scmp.ne.s32.totalorder %s99, %s113
    %p115 = scmp.eq.s32.totalorder %s21, 0
    %p116 = por %p114, %p115
    %s117 = ssub.s32 %s15, %s22
    %p118 = scmp.eq.s32.totalorder %s117, 0
    %s120 = sadd.s32 %s119, 1
    %s121 = scalar_select %p118, %s119, %s120
    %p124 = pneg %p118
    %p125 = scmp.eq.s32.totalorder %s15, 1
    %p126 = por %p124, %p125
    %p127 = scmp.ne.s32.totalorder %s119, %s122
    %p128 = scmp.eq.s32.totalorder %s15, 0
    %p129 = por %p127, %p128
    %p130 = scmp.ne.s32.totalorder %s119, %s122
    %p131 = scmp.eq.s32.totalorder %s20, 1
    %p132 = por %p130, %p131
    %p133 = scmp.ne.s32.totalorder %s122, %s123
    %p134 = scmp.eq.s32.totalorder %s20, 0
    %p135 = por %p133, %p134
    %p136 = scmp.ne.s32.totalorder %s122, %s123
    %p137 = scmp.eq.s32.totalorder %s21, 1
    %p138 = por %p136, %p137
    %p140 = scmp.ne.s32.totalorder %s123, %s139
    %p141 = scmp.eq.s32.totalorder %s21, 0
    %p142 = por %p140, %p141
    %p143 = scmp.le.s32.totalorder 1, %s15
    %p144 = scmp.lt.s32.totalorder %s15, 3
    %p145 = pnand %p143, %p144
    %p146 = pneg %p145
    // Predicated region
    $region9: #{tpu_custom_call.1} parent=5 // pred_check
      _
    $region10: #{tpu_custom_call.1} parent=5 // pred_check_branch
      %148 = sbr.rel (%p145) target = $region12
    $region11: #{tpu_custom_call.1} parent=5 // pred_region
      %s149 = ssub.s32 %s15, 1
      // Predicated region
      $region13: #{tpu_custom_call.1} parent=11 // pred_check
        %p150 = pneg %p88
      $region14: #{tpu_custom_call.1} parent=11 // pred_check_branch
        %152 = sbr.rel (%p150) target = $region16
      $region15: #{tpu_custom_call.1} parent=11 // pred_region
        _
      $region16: #{tpu_custom_call.1} parent=11 // pred_fallthru
        _
      // Predicated region
      $region17: #{tpu_custom_call.1} parent=11 // pred_check
        %p153 = pneg %p109
      $region18: #{tpu_custom_call.1} parent=11 // pred_check_branch
        %155 = sbr.rel (%p153) target = $region20
      $region19: #{tpu_custom_call.1} parent=11 // pred_region
        _
      $region20: #{tpu_custom_call.1} parent=11 // pred_fallthru
        _
    $region12: #{tpu_custom_call.1} parent=5 // pred_fallthru
      _
    %p156 = scmp.lt.s32.totalorder %s15, 2
    // Predicated region
    $region21: #{tpu_custom_call.1} parent=5 // pred_check
      %p157 = pneg %p156
    $region22: #{tpu_custom_call.1} parent=5 // pred_check_branch
      %159 = sbr.rel (%p157) target = $region24
    $region23: #{tpu_custom_call.1} parent=5 // pred_region
      // Predicated region
      $region25: #{tpu_custom_call.1} parent=23 // pred_check
        %p160 = pneg %p35
      $region26: #{tpu_custom_call.1} parent=23 // pred_check_branch
        %162 = sbr.rel (%p160) target = $region28
      $region27: #{tpu_custom_call.1} parent=23 // pred_region
        %p163 = scmp.lt.s32.totalorder %s15, 1
        %s164 = scalar_select %p163, %s15, 1
        %s165 = smul.addr %s164, 8
        %s166 = scalar_lea.vmem %s1, %s165
      $region28: #{tpu_custom_call.1} parent=23 // pred_fallthru
        _
      // Predicated region
      $region29: #{tpu_custom_call.1} parent=23 // pred_check
        %p167 = pneg %p61
      $region30: #{tpu_custom_call.1} parent=23 // pred_check_branch
        %169 = sbr.rel (%p167) target = $region32
      $region31: #{tpu_custom_call.1} parent=23 // pred_region
        %p170 = scmp.lt.s32.totalorder %s15, 1
        %s171 = scalar_select %p170, %s15, 1
        %s172 = smul.addr %s171, 8
        %s173 = scalar_lea.vmem %s2, %s172
      $region32: #{tpu_custom_call.1} parent=23 // pred_fallthru
        _
    $region24: #{tpu_custom_call.1} parent=5 // pred_fallthru
      _
    %p174 = scmp.le.s32.totalorder 1, %s15
    %p175 = scmp.lt.s32.totalorder %s15, 3
    %p176 = pnand %p174, %p175
    %p177 = pneg %p176
    // Predicated region
    $region33: #{tpu_custom_call.1} parent=5 // pred_check
      _
    $region34: #{tpu_custom_call.1} parent=5 // pred_check_branch
      %179 = sbr.rel (%p176) target = $region36
    $region35: #{tpu_custom_call.1} parent=5 // pred_region
      %s180 = ssub.s32 %s15, 1
      %p181 = scmp.lt.s32.totalorder %s20, 1
      %s182 = scalar_select %p181, %s20, 1
      %s183 = smul.addr %s182, 8
      %s184 = scalar_lea.vmem %s1, %s183
      %p185 = pneg %p41
      %p186 = pneg %p38
      %p187 = scmp.lt.s32.totalorder %s20, 1
      %s188 = scalar_select %p187, %s20, 1
      %s189 = smul.addr %s188, 8
      %s190 = scalar_lea.vmem %s2, %s189
      %p191 = pneg %p67
      %p192 = pneg %p64
      %p193 = pneg %p88
      %p194 = pneg %p85
      %p195 = pneg %p109
      %p196 = pneg %p106
      %p197 = pneg %p135
      %p198 = pneg %p132
      %p199 = scmp.lt.s32.totalorder %s20, 1
      %s200 = scalar_select %p199, %s20, 1
      %s201 = smul.addr %s200, 8
      %s202 = scalar_lea.vmem %s5, %s201
      %p203 = scmp.lt.s32.totalorder %s20, 1
      %s204 = scalar_select %p203, %s20, 1
      %s205 = smul.addr %s204, 8
      %s206 = scalar_lea.vmem %s1, %s205
      %p207 = scmp.lt.s32.totalorder %s20, 1
      %s208 = scalar_select %p207, %s20, 1
      %s209 = smul.addr %s208, 8
      %s210 = scalar_lea.vmem %s2, %s209
      %p211 = scmp.lt.s32.totalorder %s20, 1
      %s212 = scalar_select %p211, %s20, 1
      %s213 = smul.addr %s212, 8
      %s214 = scalar_lea.vmem %s5, %s213
      %v215 = vld [vmem:[%s3] sm:$0xf]
      %v216 = vld [vmem:[%s4] sm:$0x1]
      %v217 = vld [vmem:[%s206] sm:$0xff]
      %v218 = vld [vmem:[%s210] sm:$0xff]
      %vm219 = vcmask 261120
      %v221 = vsel %vm219, %v217, 0
      %v224 = vsel %vm219, %v215, 0
      %226 = vmatprep.subr.mxu0 0.0
      %v227 = vand.u32 %v224, 4294901760
      %228 = vmatpush1.xpose.msra.mxu0 %v227
      %229 = vmatprep.subr.mxu0 0.0
      %230 = vmatpush1.xpose.msra.mxu0 0.0
      %231 = vmatprep.subr.mxu0 0.0
      %232 = vmatpush1.xpose.msra.mxu0 0.0
      %233 = vmatprep.subr.mxu0 0.0
      %234 = vmatpush1.xpose.msra.mxu0 0.0
      %235 = vmatprep.subr.mxu0 0.0
      %236 = vmatpush1.xpose.msra.mxu0 0.0
      %237 = vmatprep.subr.mxu0 0.0
      %238 = vmatpush1.xpose.msra.mxu0 0.0
      %239 = vmatprep.subr.mxu0 0.0
      %240 = vmatpush1.xpose.msra.mxu0 0.0
      %241 = vmatprep.subr.mxu0 0.0
      %242 = vmatpush1.xpose.msra.mxu0 0.0
      %243 = vmatprep.subr.mxu0 0.0
      %244 = vmatpush1.xpose.msra.mxu0 0.0
      %245 = vmatprep.subr.mxu0 0.0
      %246 = vmatpush1.xpose.msra.mxu0 0.0
      %247 = vmatprep.subr.mxu0 0.0
      %248 = vmatpush1.xpose.msra.mxu0 0.0
      %249 = vmatprep.subr.mxu0 0.0
      %250 = vmatpush1.xpose.msra.mxu0 0.0
      %251 = vmatprep.subr.mxu0 0.0
      %252 = vmatpush1.xpose.msra.mxu0 0.0
      %253 = vmatprep.subr.mxu0 0.0
      %254 = vmatpush1.xpose.msra.mxu0 0.0
      %255 = vmatprep.subr.mxu0 0.0
      %256 = vmatpush1.xpose.msra.mxu0 0.0
      %257 = vmatprep.subr.mxu0 0.0
      %258 = vmatpush1.xpose.msra.mxu0 0.0
      %259 = vmatprep.subr.mxu0 0.0
      %260 = vmatpush1.xpose.msra.mxu0 0.0
      %261 = vmatprep.subr.mxu0 0.0
      %262 = vmatpush1.xpose.msra.mxu0 0.0
      %263 = vmatprep.subr.mxu0 0.0
      %264 = vmatpush1.xpose.msra.mxu0 0.0
      %265 = vmatprep.subr.mxu0 0.0
      %266 = vmatpush1.xpose.msra.mxu0 0.0
      %267 = vmatprep.subr.mxu0 0.0
      %268 = vmatpush1.xpose.msra.mxu0 0.0
      %269 = vmatprep.subr.mxu0 0.0
      %270 = vmatpush1.xpose.msra.mxu0 0.0
      %271 = vmatprep.subr.mxu0 0.0
      %272 = vmatpush1.xpose.msra.mxu0 0.0
      %273 = vmatprep.subr.mxu0 0.0
      %274 = vmatpush1.xpose.msra.mxu0 0.0
      %275 = vmatprep.subr.mxu0 0.0
      %276 = vmatpush1.xpose.msra.mxu0 0.0
      %277 = vmatprep.subr.mxu0 0.0
      %278 = vmatpush1.xpose.msra.mxu0 0.0
      %279 = vmatprep.subr.mxu0 0.0
      %280 = vmatpush1.xpose.msra.mxu0 0.0
      %281 = vmatprep.subr.mxu0 0.0
      %282 = vmatpush1.xpose.msra.mxu0 0.0
      %283 = vmatprep.subr.mxu0 0.0
      %284 = vmatpush1.xpose.msra.mxu0 0.0
      %285 = vmatprep.subr.mxu0 0.0
      %286 = vmatpush1.xpose.msra.mxu0 0.0
      %287 = vmatprep.subr.mxu0 0.0
      %288 = vmatpush1.xpose.msra.mxu0 0.0
      %289 = vmatprep.subr.mxu0 0.0
      %290 = vmatpush1.xpose.msra.mxu0 0.0
      %291 = vmatprep.mubr.f32.mxu0 0.0
      %v292 = vand.u32 %v221, 4294901760
      %v293 = vsub.f32 %v221, %v292
      %v294 = vand.u32 %v293, 4294901760
      %v295 = vsub.f32 %v293, %v294
      %v296 = vand.u32 %v295, 4294901760
      %297 = vmatmul.mubr.f32.gmra.mrb[0].mxu0 %v296
      %v298 = vpop.f32.mrb[0].mxu0
      %v299 = vadd.f32 0.0, %v298
      %v300 = vpop.f32.mrb[0].mxu0
      %301 = vdwg.mxu0
      %302 = vmatprep.subr.mxu0 0.0
      %v303 = vand.u32 %v224, 4294901760
      %v304 = vsub.f32 %v224, %v303
      %v305 = vand.u32 %v304, 4294901760
      %v306 = vsub.f32 %v304, %v305
      %v307 = vand.u32 %v306, 4294901760
      %308 = vmatpush1.xpose.msra.mxu0 %v307
      %309 = vmatprep.subr.mxu0 0.0
      %310 = vmatpush1.xpose.msra.mxu0 0.0
      %311 = vmatprep.subr.mxu0 0.0
      %312 = vmatpush1.xpose.msra.mxu0 0.0
      %313 = vmatprep.subr.mxu0 0.0
      %314 = vmatpush1.xpose.msra.mxu0 0.0
      %315 = vmatprep.subr.mxu0 0.0
      %316 = vmatpush1.xpose.msra.mxu0 0.0
      %317 = vmatprep.subr.mxu0 0.0
      %318 = vmatpush1.xpose.msra.mxu0 0.0
      %319 = vmatprep.subr.mxu0 0.0
      %320 = vmatpush1.xpose.msra.mxu0 0.0
      %321 = vmatprep.subr.mxu0 0.0
      %322 = vmatpush1.xpose.msra.mxu0 0.0
      %323 = vmatprep.subr.mxu0 0.0
      %324 = vmatpush1.xpose.msra.mxu0 0.0
      %325 = vmatprep.subr.mxu0 0.0
      %326 = vmatpush1.xpose.msra.mxu0 0.0
      %327 = vmatprep.subr.mxu0 0.0
      %328 = vmatpush1.xpose.msra.mxu0 0.0
      %329 = vmatprep.subr.mxu0 0.0
      %330 = vmatpush1.xpose.msra.mxu0 0.0
      %331 = vmatprep.subr.mxu0 0.0
      %332 = vmatpush1.xpose.msra.mxu0 0.0
      %333 = vmatprep.subr.mxu0 0.0
      %334 = vmatpush1.xpose.msra.mxu0 0.0
      %335 = vmatprep.subr.mxu0 0.0
      %336 = vmatpush1.xpose.msra.mxu0 0.0
      %337 = vmatprep.subr.mxu0 0.0
      %338 = vmatpush1.xpose.msra.mxu0 0.0
      %339 = vmatprep.subr.mxu0 0.0
      %340 = vmatpush1.xpose.msra.mxu0 0.0
      %341 = vmatprep.subr.mxu0 0.0
      %342 = vmatpush1.xpose.msra.mxu0 0.0
      %343 = vmatprep.subr.mxu0 0.0
      %344 = vmatpush1.xpose.msra.mxu0 0.0
      %345 = vmatprep.subr.mxu0 0.0
      %346 = vmatpush1.xpose.msra.mxu0 0.0
      %347 = vmatprep.subr.mxu0 0.0
      %348 = vmatpush1.xpose.msra.mxu0 0.0
      %349 = vmatprep.subr.mxu0 0.0
      %350 = vmatpush1.xpose.msra.mxu0 0.0
      %351 = vmatprep.subr.mxu0 0.0
      %352 = vmatpush1.xpose.msra.mxu0 0.0
      %353 = vmatprep.subr.mxu0 0.0
      %354 = vmatpush1.xpose.msra.mxu0 0.0
      %355 = vmatprep.subr.mxu0 0.0
      %356 = vmatpush1.xpose.msra.mxu0 0.0
      %357 = vmatprep.subr.mxu0 0.0
      %358 = vmatpush1.xpose.msra.mxu0 0.0
      %359 = vmatprep.subr.mxu0 0.0
      %360 = vmatpush1.xpose.msra.mxu0 0.0
      %361 = vmatprep.subr.mxu0 0.0
      %362 = vmatpush1.xpose.msra.mxu0 0.0
      %363 = vmatprep.subr.mxu0 0.0
      %364 = vmatpush1.xpose.msra.mxu0 0.0
      %365 = vmatprep.subr.mxu0 0.0
      %366 = vmatpush1.xpose.msra.mxu0 0.0
      %367 = vmatprep.subr.mxu0 0.0
      %368 = vmatpush1.xpose.msra.mxu0 0.0
      %369 = vmatprep.subr.mxu0 0.0
      %370 = vmatpush1.xpose.msra.mxu0 0.0
      %371 = vmatprep.mubr.f32.mxu0 0.0
      %v372 = vand.u32 %v221, 4294901760
      %373 = vmatmul.mubr.f32.gmra.mrb[0].mxu0 %v372
      %v374 = vpop.f32.mrb[0].mxu0
      %v375 = vadd.f32 %v299, %v374
      %v376 = vpop.f32.mrb[0].mxu0
      %377 = vdwg.mxu0
      %378 = vmatprep.subr.mxu0 0.0
      %v379 = vand.u32 %v224, 4294901760
      %v380 = vsub.f32 %v224, %v379
      %381 = vmatpush1.xpose.msra.mxu0 %v380
      %382 = vmatprep.subr.mxu0 0.0
      %383 = vmatpush1.xpose.msra.mxu0 0.0
      %384 = vmatprep.subr.mxu0 0.0
      %385 = vmatpush1.xpose.msra.mxu0 0.0
      %386 = vmatprep.subr.mxu0 0.0
      %387 = vmatpush1.xpose.msra.mxu0 0.0
      %388 = vmatprep.subr.mxu0 0.0
      %389 = vmatpush1.xpose.msra.mxu0 0.0
      %390 = vmatprep.subr.mxu0 0.0
      %391 = vmatpush1.xpose.msra.mxu0 0.0
      %392 = vmatprep.subr.mxu0 0.0
      %393 = vmatpush1.xpose.msra.mxu0 0.0
      %394 = vmatprep.subr.mxu0 0.0
      %395 = vmatpush1.xpose.msra.mxu0 0.0
      %396 = vmatprep.subr.mxu0 0.0
      %397 = vmatpush1.xpose.msra.mxu0 0.0
      %398 = vmatprep.subr.mxu0 0.0
      %399 = vmatpush1.xpose.msra.mxu0 0.0
      %400 = vmatprep.subr.mxu0 0.0
      %401 = vmatpush1.xpose.msra.mxu0 0.0
      %402 = vmatprep.subr.mxu0 0.0
      %403 = vmatpush1.xpose.msra.mxu0 0.0
      %404 = vmatprep.subr.mxu0 0.0
      %405 = vmatpush1.xpose.msra.mxu0 0.0
      %406 = vmatprep.subr.mxu0 0.0
      %407 = vmatpush1.xpose.msra.mxu0 0.0
      %408 = vmatprep.subr.mxu0 0.0
      %409 = vmatpush1.xpose.msra.mxu0 0.0
      %410 = vmatprep.subr.mxu0 0.0
      %411 = vmatpush1.xpose.msra.mxu0 0.0
      %412 = vmatprep.subr.mxu0 0.0
      %413 = vmatpush1.xpose.msra.mxu0 0.0
      %414 = vmatprep.subr.mxu0 0.0
      %415 = vmatpush1.xpose.msra.mxu0 0.0
      %416 = vmatprep.subr.mxu0 0.0
      %417 = vmatpush1.xpose.msra.mxu0 0.0
      %418 = vmatprep.subr.mxu0 0.0
      %419 = vmatpush1.xpose.msra.mxu0 0.0
      %420 = vmatprep.subr.mxu0 0.0
      %421 = vmatpush1.xpose.msra.mxu0 0.0
      %422 = vmatprep.subr.mxu0 0.0
      %423 = vmatpush1.xpose.msra.mxu0 0.0
      %424 = vmatprep.subr.mxu0 0.0
      %425 = vmatpush1.xpose.msra.mxu0 0.0
      %426 = vmatprep.subr.mxu0 0.0
      %427 = vmatpush1.xpose.msra.mxu0 0.0
      %428 = vmatprep.subr.mxu0 0.0
      %429 = vmatpush1.xpose.msra.mxu0 0.0
      %430 = vmatprep.subr.mxu0 0.0
      %431 = vmatpush1.xpose.msra.mxu0 0.0
      %432 = vmatprep.subr.mxu0 0.0
      %433 = vmatpush1.xpose.msra.mxu0 0.0
      %434 = vmatprep.subr.mxu0 0.0
      %435 = vmatpush1.xpose.msra.mxu0 0.0
      %436 = vmatprep.subr.mxu0 0.0
      %437 = vmatpush1.xpose.msra.mxu0 0.0
      %438 = vmatprep.subr.mxu0 0.0
      %439 = vmatpush1.xpose.msra.mxu0 0.0
      %440 = vmatprep.subr.mxu0 0.0
      %441 = vmatpush1.xpose.msra.mxu0 0.0
      %442 = vmatprep.subr.mxu0 0.0
      %443 = vmatpush1.xpose.msra.mxu0 0.0
      %444 = vmatprep.mubr.f32.mxu0 0.0
      %v445 = vand.u32 %v221, 4294901760
      %v446 = vsub.f32 %v221, %v445
      %447 = vmatmul.mubr.f32.gmra.mrb[0].mxu0 %v446
      %v448 = vpop.f32.mrb[0].mxu0
      %v449 = vadd.f32 %v375, %v448
      %v450 = vpop.f32.mrb[0].mxu0
      %451 = vdwg.mxu0
      %452 = vmatprep.subr.mxu0 0.0
      %v453 = vand.u32 %v224, 4294901760
      %454 = vmatpush1.xpose.msra.mxu0 %v453
      %455 = vmatprep.subr.mxu0 0.0
      %456 = vmatpush1.xpose.msra.mxu0 0.0
      %457 = vmatprep.subr.mxu0 0.0
      %458 = vmatpush1.xpose.msra.mxu0 0.0
      %459 = vmatprep.subr.mxu0 0.0
      %460 = vmatpush1.xpose.msra.mxu0 0.0
      %461 = vmatprep.subr.mxu0 0.0
      %462 = vmatpush1.xpose.msra.mxu0 0.0
      %463 = vmatprep.subr.mxu0 0.0
      %464 = vmatpush1.xpose.msra.mxu0 0.0
      %465 = vmatprep.subr.mxu0 0.0
      %466 = vmatpush1.xpose.msra.mxu0 0.0
      %467 = vmatprep.subr.mxu0 0.0
      %468 = vmatpush1.xpose.msra.mxu0 0.0
      %469 = vmatprep.subr.mxu0 0.0
      %470 = vmatpush1.xpose.msra.mxu0 0.0
      %471 = vmatprep.subr.mxu0 0.0
      %472 = vmatpush1.xpose.msra.mxu0 0.0
      %473 = vmatprep.subr.mxu0 0.0
      %474 = vmatpush1.xpose.msra.mxu0 0.0
      %475 = vmatprep.subr.mxu0 0.0
      %476 = vmatpush1.xpose.msra.mxu0 0.0
      %477 = vmatprep.subr.mxu0 0.0
      %478 = vmatpush1.xpose.msra.mxu0 0.0
      %479 = vmatprep.subr.mxu0 0.0
      %480 = vmatpush1.xpose.msra.mxu0 0.0
      %481 = vmatprep.subr.mxu0 0.0
      %482 = vmatpush1.xpose.msra.mxu0 0.0
      %483 = vmatprep.subr.mxu0 0.0
      %484 = vmatpush1.xpose.msra.mxu0 0.0
      %485 = vmatprep.subr.mxu0 0.0
      %486 = vmatpush1.xpose.msra.mxu0 0.0
      %487 = vmatprep.subr.mxu0 0.0
      %488 = vmatpush1.xpose.msra.mxu0 0.0
      %489 = vmatprep.subr.mxu0 0.0
      %490 = vmatpush1.xpose.msra.mxu0 0.0
      %491 = vmatprep.subr.mxu0 0.0
      %492 = vmatpush1.xpose.msra.mxu0 0.0
      %493 = vmatprep.subr.mxu0 0.0
      %494 = vmatpush1.xpose.msra.mxu0 0.0
      %495 = vmatprep.subr.mxu0 0.0
      %496 = vmatpush1.xpose.msra.mxu0 0.0
      %497 = vmatprep.subr.mxu0 0.0
      %498 = vmatpush1.xpose.msra.mxu0 0.0
      %499 = vmatprep.subr.mxu0 0.0
      %500 = vmatpush1.xpose.msra.mxu0 0.0
      %501 = vmatprep.subr.mxu0 0.0
      %502 = vmatpush1.xpose.msra.mxu0 0.0
      %503 = vmatprep.subr.mxu0 0.0
      %504 = vmatpush1.xpose.msra.mxu0 0.0
      %505 = vmatprep.subr.mxu0 0.0
      %506 = vmatpush1.xpose.msra.mxu0 0.0
      %507 = vmatprep.subr.mxu0 0.0
      %508 = vmatpush1.xpose.msra.mxu0 0.0
      %509 = vmatprep.subr.mxu0 0.0
      %510 = vmatpush1.xpose.msra.mxu0 0.0
      %511 = vmatprep.subr.mxu0 0.0
      %512 = vmatpush1.xpose.msra.mxu0 0.0
      %513 = vmatprep.subr.mxu0 0.0
      %514 = vmatpush1.xpose.msra.mxu0 0.0
      %515 = vmatprep.subr.mxu0 0.0
      %516 = vmatpush1.xpose.msra.mxu0 0.0
      %517 = vmatprep.mubr.f32.mxu0 0.0
      %v518 = vand.u32 %v221, 4294901760
      %v519 = vsub.f32 %v221, %v518
      %v520 = vand.u32 %v519, 4294901760
      %521 = vmatmul.mubr.f32.gmra.mrb[0].mxu0 %v520
      %v522 = vpop.f32.mrb[0].mxu0
      %v523 = vadd.f32 %v449, %v522
      %v524 = vpop.f32.mrb[0].mxu0
      %525 = vdwg.mxu0
      %526 = vmatprep.subr.mxu0 0.0
      %v527 = vand.u32 %v224, 4294901760
      %v528 = vsub.f32 %v224, %v527
      %v529 = vand.u32 %v528, 4294901760
      %530 = vmatpush1.xpose.msra.mxu0 %v529
      %531 = vmatprep.subr.mxu0 0.0
      %532 = vmatpush1.xpose.msra.mxu0 0.0
      %533 = vmatprep.subr.mxu0 0.0
      %534 = vmatpush1.xpose.msra.mxu0 0.0
      %535 = vmatprep.subr.mxu0 0.0
      %536 = vmatpush1.xpose.msra.mxu0 0.0
      %537 = vmatprep.subr.mxu0 0.0
      %538 = vmatpush1.xpose.msra.mxu0 0.0
      %539 = vmatprep.subr.mxu0 0.0
      %540 = vmatpush1.xpose.msra.mxu0 0.0
      %541 = vmatprep.subr.mxu0 0.0
      %542 = vmatpush1.xpose.msra.mxu0 0.0
      %543 = vmatprep.subr.mxu0 0.0
      %544 = vmatpush1.xpose.msra.mxu0 0.0
      %545 = vmatprep.subr.mxu0 0.0
      %546 = vmatpush1.xpose.msra.mxu0 0.0
      %547 = vmatprep.subr.mxu0 0.0
      %548 = vmatpush1.xpose.msra.mxu0 0.0
      %549 = vmatprep.subr.mxu0 0.0
      %550 = vmatpush1.xpose.msra.mxu0 0.0
      %551 = vmatprep.subr.mxu0 0.0
      %552 = vmatpush1.xpose.msra.mxu0 0.0
      %553 = vmatprep.subr.mxu0 0.0
      %554 = vmatpush1.xpose.msra.mxu0 0.0
      %555 = vmatprep.subr.mxu0 0.0
      %556 = vmatpush1.xpose.msra.mxu0 0.0
      %557 = vmatprep.subr.mxu0 0.0
      %558 = vmatpush1.xpose.msra.mxu0 0.0
      %559 = vmatprep.subr.mxu0 0.0
      %560 = vmatpush1.xpose.msra.mxu0 0.0
      %561 = vmatprep.subr.mxu0 0.0
      %562 = vmatpush1.xpose.msra.mxu0 0.0
      %563 = vmatprep.subr.mxu0 0.0
      %564 = vmatpush1.xpose.msra.mxu0 0.0
      %565 = vmatprep.subr.mxu0 0.0
      %566 = vmatpush1.xpose.msra.mxu0 0.0
      %567 = vmatprep.subr.mxu0 0.0
      %568 = vmatpush1.xpose.msra.mxu0 0.0
      %569 = vmatprep.subr.mxu0 0.0
      %570 = vmatpush1.xpose.msra.mxu0 0.0
      %571 = vmatprep.subr.mxu0 0.0
      %572 = vmatpush1.xpose.msra.mxu0 0.0
      %573 = vmatprep.subr.mxu0 0.0
      %574 = vmatpush1.xpose.msra.mxu0 0.0
      %575 = vmatprep.subr.mxu0 0.0
      %576 = vmatpush1.xpose.msra.mxu0 0.0
      %577 = vmatprep.subr.mxu0 0.0
      %578 = vmatpush1.xpose.msra.mxu0 0.0
      %579 = vmatprep.subr.mxu0 0.0
      %580 = vmatpush1.xpose.msra.mxu0 0.0
      %581 = vmatprep.subr.mxu0 0.0
      %582 = vmatpush1.xpose.msra.mxu0 0.0
      %583 = vmatprep.subr.mxu0 0.0
      %584 = vmatpush1.xpose.msra.mxu0 0.0
      %585 = vmatprep.subr.mxu0 0.0
      %586 = vmatpush1.xpose.msra.mxu0 0.0
      %587 = vmatprep.subr.mxu0 0.0
      %588 = vmatpush1.xpose.msra.mxu0 0.0
      %589 = vmatprep.subr.mxu0 0.0
      %590 = vmatpush1.xpose.msra.mxu0 0.0
      %591 = vmatprep.subr.mxu0 0.0
      %592 = vmatpush1.xpose.msra.mxu0 0.0
      %593 = vmatprep.mubr.f32.mxu0 0.0
      %v594 = vand.u32 %v221, 4294901760
      %595 = vmatmul.mubr.f32.gmra.mrb[0].mxu0 %v594
      %v596 = vpop.f32.mrb[0].mxu0
      %v597 = vadd.f32 %v523, %v596
      %v598 = vpop.f32.mrb[0].mxu0
      %599 = vdwg.mxu0
      %600 = vmatprep.subr.mxu0 0.0
      %v601 = vand.u32 %v224, 4294901760
      %602 = vmatpush1.xpose.msra.mxu0 %v601
      %603 = vmatprep.subr.mxu0 0.0
      %604 = vmatpush1.xpose.msra.mxu0 0.0
      %605 = vmatprep.subr.mxu0 0.0
      %606 = vmatpush1.xpose.msra.mxu0 0.0
      %607 = vmatprep.subr.mxu0 0.0
      %608 = vmatpush1.xpose.msra.mxu0 0.0
      %609 = vmatprep.subr.mxu0 0.0
      %610 = vmatpush1.xpose.msra.mxu0 0.0
      %611 = vmatprep.subr.mxu0 0.0
      %612 = vmatpush1.xpose.msra.mxu0 0.0
      %613 = vmatprep.subr.mxu0 0.0
      %614 = vmatpush1.xpose.msra.mxu0 0.0
      %615 = vmatprep.subr.mxu0 0.0
      %616 = vmatpush1.xpose.msra.mxu0 0.0
      %617 = vmatprep.subr.mxu0 0.0
      %618 = vmatpush1.xpose.msra.mxu0 0.0
      %619 = vmatprep.subr.mxu0 0.0
      %620 = vmatpush1.xpose.msra.mxu0 0.0
      %621 = vmatprep.subr.mxu0 0.0
      %622 = vmatpush1.xpose.msra.mxu0 0.0
      %623 = vmatprep.subr.mxu0 0.0
      %624 = vmatpush1.xpose.msra.mxu0 0.0
      %625 = vmatprep.subr.mxu0 0.0
      %626 = vmatpush1.xpose.msra.mxu0 0.0
      %627 = vmatprep.subr.mxu0 0.0
      %628 = vmatpush1.xpose.msra.mxu0 0.0
      %629 = vmatprep.subr.mxu0 0.0
      %630 = vmatpush1.xpose.msra.mxu0 0.0
      %631 = vmatprep.subr.mxu0 0.0
      %632 = vmatpush1.xpose.msra.mxu0 0.0
      %633 = vmatprep.subr.mxu0 0.0
      %634 = vmatpush1.xpose.msra.mxu0 0.0
      %635 = vmatprep.subr.mxu0 0.0
      %636 = vmatpush1.xpose.msra.mxu0 0.0
      %637 = vmatprep.subr.mxu0 0.0
      %638 = vmatpush1.xpose.msra.mxu0 0.0
      %639 = vmatprep.subr.mxu0 0.0
      %640 = vmatpush1.xpose.msra.mxu0 0.0
      %641 = vmatprep.subr.mxu0 0.0
      %642 = vmatpush1.xpose.msra.mxu0 0.0
      %643 = vmatprep.subr.mxu0 0.0
      %644 = vmatpush1.xpose.msra.mxu0 0.0
      %645 = vmatprep.subr.mxu0 0.0
      %646 = vmatpush1.xpose.msra.mxu0 0.0
      %647 = vmatprep.subr.mxu0 0.0
      %648 = vmatpush1.xpose.msra.mxu0 0.0
      %649 = vmatprep.subr.mxu0 0.0
      %650 = vmatpush1.xpose.msra.mxu0 0.0
      %651 = vmatprep.subr.mxu0 0.0
      %652 = vmatpush1.xpose.msra.mxu0 0.0
      %653 = vmatprep.subr.mxu0 0.0
      %654 = vmatpush1.xpose.msra.mxu0 0.0
      %655 = vmatprep.subr.mxu0 0.0
      %656 = vmatpush1.xpose.msra.mxu0 0.0
      %657 = vmatprep.subr.mxu0 0.0
      %658 = vmatpush1.xpose.msra.mxu0 0.0
      %659 = vmatprep.subr.mxu0 0.0
      %660 = vmatpush1.xpose.msra.mxu0 0.0
      %661 = vmatprep.subr.mxu0 0.0
      %662 = vmatpush1.xpose.msra.mxu0 0.0
      %663 = vmatprep.subr.mxu0 0.0
      %664 = vmatpush1.xpose.msra.mxu0 0.0
      %665 = vmatprep.mubr.f32.mxu0 0.0
      %v666 = vand.u32 %v221, 4294901760
      %667 = vmatmul.mubr.f32.gmra.mrb[0].mxu0 %v666
      %v668 = vpop.f32.mrb[0].mxu0
      %v669 = vadd.f32 %v597, %v668
      %v670 = vpop.f32.mrb[0].mxu0
      %671 = vdwg.mxu0
      %v672 = vmul.f32 %v217, %v217
      %v673 = vsel %vm219, %v672, 0.0
      %674 = vadd.xlane.f32.xlu0 %v673
      %v675 = vpop.xlane.xlu0 %674
      %v676 = vrsqrt.pop %v675
      %v677 = vmul.f32 %v675, %v676
      %vm678 = vcmp.eq.f32.partialorder %v675, inf
      %v679 = vsel %vm678, %v675, %v677
      %vm680 = vcmp.eq.f32.partialorder %v675, 0.0
      %v681 = vand.u32 %v675, 2147483648
      %v682 = vsel %vm680, %v681, %v679
      %v684 = vlaneseq
      %v685 = vshrl.u32 %v684, 7
      %v686 = vsub.s32 0, %v685
      %v687 = vrot.slane %v216, %v686
      %v689 = vmul.f32 %v682, %v687
      %v690 = vmax.f32 %v689, 1e-08
      %v691 = vrcp.pop %v690
      %v692 = vmul.f32 %v669, %v691
      %v693 = vmul.f32 %v692, 10.0
      %695 = vset.pattern.permute.xlu0 0
      %696 = vperm.xlu0 %695, %v218
      %v697 = vpop.permute.xlu0 %696
      %v699 = vmul.f32 %v693, %v697
      %v700 = vlaneseq
      %v701 = vshrl.u32 %v700, 7
      %vm702 = vcmp.lt.s32.totalorder %v701, 0
      %vm703 = vcmp.lt.s32.totalorder %v701, 1
      %vm704 = vcmp.lt.s32.totalorder %v701, 2
      %vm705 = vcmp.lt.s32.totalorder %v701, 3
      %vm706 = vcmp.lt.s32.totalorder %v701, 4
      %vm707 = vcmp.lt.s32.totalorder %v701, 5
      %vm708 = vcmp.lt.s32.totalorder %v701, 6
      %vm709 = vcmp.lt.s32.totalorder %v701, 7
      %v711 = vcombine.high %v699, %v699
      %v713 = vunpack.c.l.s4 1966171168
      %v714 = vunpack.c.0.s8 %v713
      %v715 = vlaneseq
      %v716 = vshrl.u32 %v715, 7
      %v717 = vsub.s32 %v714, %v716
      %v718 = vrot.slane %v699, %v717
      %v720 = vunpack.c.l.s4 1966171168
      %v721 = vunpack.c.0.s8 %v720
      %v722 = vlaneseq
      %v723 = vshrl.u32 %v722, 7
      %v724 = vsub.s32 %v721, %v723
      %v725 = vrot.slane %v711, %v724
      %v726 = vcombine.high %v718, %v718
      %v727 = vcombine.high %v725, %v725
      %v729 = vunpack.c.l.s4 1966171168
      %v730 = vunpack.c.0.s8 %v729
      %v731 = vlaneseq
      %v732 = vshrl.u32 %v731, 7
      %v733 = vsub.s32 %v730, %v732
      %v734 = vrot.slane %v718, %v733
      %v736 = vunpack.c.l.s4 1966171168
      %v737 = vunpack.c.0.s8 %v736
      %v738 = vlaneseq
      %v739 = vshrl.u32 %v738, 7
      %v740 = vsub.s32 %v737, %v739
      %v741 = vrot.slane %v725, %v740
      %v743 = vunpack.c.l.s4 1966171168
      %v744 = vunpack.c.0.s8 %v743
      %v745 = vlaneseq
      %v746 = vshrl.u32 %v745, 7
      %v747 = vsub.s32 %v744, %v746
      %v748 = vrot.slane %v726, %v747
      %v750 = vunpack.c.l.s4 1966171168
      %v751 = vunpack.c.0.s8 %v750
      %v752 = vlaneseq
      %v753 = vshrl.u32 %v752, 7
      %v754 = vsub.s32 %v751, %v753
      %v755 = vrot.slane %v727, %v754
      %v756 = vcombine.high %v734, %v734
      %v757 = vcombine.high %v741, %v741
      %v758 = vcombine.high %v748, %v748
      %v759 = vcombine.high %v755, %v755
      %v760 = vlaneseq
      %v761 = vshrl.u32 %v760, 7
      %v762 = vsub.s32 0, %v761
      %v763 = vrot.slane %v734, %v762
      %v764 = vlaneseq
      %v765 = vshrl.u32 %v764, 7
      %v766 = vsub.s32 0, %v765
      %v767 = vrot.slane %v748, %v766
      %v768 = vlaneseq
      %v769 = vshrl.u32 %v768, 7
      %v770 = vsub.s32 0, %v769
      %v771 = vrot.slane %v756, %v770
      %v772 = vlaneseq
      %v773 = vshrl.u32 %v772, 7
      %v774 = vsub.s32 0, %v773
      %v775 = vrot.slane %v758, %v774
      %v776 = vlaneseq
      %v777 = vshrl.u32 %v776, 7
      %v778 = vsub.s32 0, %v777
      %v779 = vrot.slane %v741, %v778
      %v780 = vlaneseq
      %v781 = vshrl.u32 %v780, 7
      %v782 = vsub.s32 0, %v781
      %v783 = vrot.slane %v755, %v782
      %v784 = vlaneseq
      %v785 = vshrl.u32 %v784, 7
      %v786 = vsub.s32 0, %v785
      %v787 = vrot.slane %v757, %v786
      %v788 = vlaneseq
      %v789 = vshrl.u32 %v788, 7
      %v790 = vsub.s32 0, %v789
      %v791 = vrot.slane %v759, %v790
      %vm800 = vcmp.gt.f32.partialorder %v699, %v763
      %vm801 = vcmp.gt.f32.partialorder %v699, %v767
      %vm802 = vcmp.gt.f32.partialorder %v699, %v771
      %vm803 = vcmp.gt.f32.partialorder %v699, %v775
      %vm804 = vcmp.gt.f32.partialorder %v699, %v779
      %vm805 = vcmp.gt.f32.partialorder %v699, %v783
      %vm806 = vcmp.gt.f32.partialorder %v699, %v787
      %vm807 = vcmp.gt.f32.partialorder %v699, %v791
      %vm808 = vcmp.eq.f32.partialorder %v699, %v763
      %vm809 = vcmp.eq.f32.partialorder %v699, %v767
      %vm810 = vcmp.eq.f32.partialorder %v699, %v771
      %vm811 = vcmp.eq.f32.partialorder %v699, %v775
      %vm812 = vcmp.eq.f32.partialorder %v699, %v779
      %vm813 = vcmp.eq.f32.partialorder %v699, %v783
      %vm814 = vcmp.eq.f32.partialorder %v699, %v787
      %vm815 = vcmp.eq.f32.partialorder %v699, %v791
      %v816 = vsel %vm702, 1, 0
      %v817 = vsel %vm703, 1, 0
      %v818 = vsel %vm704, 1, 0
      %v819 = vsel %vm705, 1, 0
      %v820 = vsel %vm706, 1, 0
      %v821 = vsel %vm707, 1, 0
      %v822 = vsel %vm708, 1, 0
      %v823 = vsel %vm709, 1, 0
      %vm824 = vcmp.eq.s32.totalorder %v816, 1
      %vm825 = vcmp.eq.s32.totalorder %v817, 1
      %vm826 = vcmp.eq.s32.totalorder %v818, 1
      %vm827 = vcmp.eq.s32.totalorder %v819, 1
      %vm828 = vcmp.eq.s32.totalorder %v820, 1
      %vm829 = vcmp.eq.s32.totalorder %v821, 1
      %vm830 = vcmp.eq.s32.totalorder %v822, 1
      %vm831 = vcmp.eq.s32.totalorder %v823, 1
      %vm832 = vmand %vm808, %vm824
      %vm833 = vmand %vm809, %vm825
      %vm834 = vmand %vm810, %vm826
      %vm835 = vmand %vm811, %vm827
      %vm836 = vmand %vm812, %vm828
      %vm837 = vmand %vm813, %vm829
      %vm838 = vmand %vm814, %vm830
      %vm839 = vmand %vm815, %vm831
      %vm840 = vmor %vm800, %vm832
      %vm841 = vmor %vm801, %vm833
      %vm842 = vmor %vm802, %vm834
      %vm843 = vmor %vm803, %vm835
      %vm844 = vmor %vm804, %vm836
      %vm845 = vmor %vm805, %vm837
      %vm846 = vmor %vm806, %vm838
      %vm847 = vmor %vm807, %vm839
      %v848 = vsel %vm840, 1, 0
      %v849 = vsel %vm841, 1, 0
      %v850 = vsel %vm842, 1, 0
      %v851 = vsel %vm843, 1, 0
      %v852 = vsel %vm844, 1, 0
      %v853 = vsel %vm845, 1, 0
      %v854 = vsel %vm846, 1, 0
      %v855 = vsel %vm847, 1, 0
      %v856 = vcvt.s32.f32 %v848
      %v857 = vcvt.s32.f32 %v849
      %v858 = vcvt.s32.f32 %v850
      %v859 = vcvt.s32.f32 %v851
      %v860 = vcvt.s32.f32 %v852
      %v861 = vcvt.s32.f32 %v853
      %v862 = vcvt.s32.f32 %v854
      %v863 = vcvt.s32.f32 %v855
      %vm864 = vcmask 31744
      %v865 = vsel %vm864, %v856, 0.0
      %v866 = vrot.slane %v865, 4
      %v867 = vadd.f32 %v865, %v866
      %v868 = vrot.slane %v867, 2
      %v869 = vadd.f32 %v867, %v868
      %v870 = vrot.slane %v869, 1
      %v871 = vadd.f32 %v869, %v870
      %v872 = vsel %vm864, %v857, 0.0
      %v873 = vrot.slane %v872, 4
      %v874 = vadd.f32 %v872, %v873
      %v875 = vrot.slane %v874, 2
      %v876 = vadd.f32 %v874, %v875
      %v877 = vrot.slane %v876, 1
      %v878 = vadd.f32 %v876, %v877
      %v879 = vsel %vm864, %v858, 0.0
      %v880 = vrot.slane %v879, 4
      %v881 = vadd.f32 %v879, %v880
      %v882 = vrot.slane %v881, 2
      %v883 = vadd.f32 %v881, %v882
      %v884 = vrot.slane %v883, 1
      %v885 = vadd.f32 %v883, %v884
      %v886 = vsel %vm864, %v859, 0.0
      %v887 = vrot.slane %v886, 4
      %v888 = vadd.f32 %v886, %v887
      %v889 = vrot.slane %v888, 2
      %v890 = vadd.f32 %v888, %v889
      %v891 = vrot.slane %v890, 1
      %v892 = vadd.f32 %v890, %v891
      %v893 = vsel %vm864, %v860, 0.0
      %v894 = vrot.slane %v893, 4
      %v895 = vadd.f32 %v893, %v894
      %v896 = vrot.slane %v895, 2
      %v897 = vadd.f32 %v895, %v896
      %v898 = vrot.slane %v897, 1
      %v899 = vadd.f32 %v897, %v898
      %v900 = vsel %vm864, %v861, 0.0
      %v901 = vrot.slane %v900, 4
      %v902 = vadd.f32 %v900, %v901
      %v903 = vrot.slane %v902, 2
      %v904 = vadd.f32 %v902, %v903
      %v905 = vrot.slane %v904, 1
      %v906 = vadd.f32 %v904, %v905
      %v907 = vsel %vm864, %v862, 0.0
      %v908 = vrot.slane %v907, 4
      %v909 = vadd.f32 %v907, %v908
      %v910 = vrot.slane %v909, 2
      %v911 = vadd.f32 %v909, %v910
      %v912 = vrot.slane %v911, 1
      %v913 = vadd.f32 %v911, %v912
      %v914 = vsel %vm864, %v863, 0.0
      %v915 = vrot.slane %v914, 4
      %v916 = vadd.f32 %v914, %v915
      %v917 = vrot.slane %v916, 2
      %v918 = vadd.f32 %v916, %v917
      %v919 = vrot.slane %v918, 1
      %v920 = vadd.f32 %v918, %v919
      %s921 = sld [smem:[#allocation3 + %s20]]
      %s922 = scvt.s32.f32 %s921
      %v923 = vstv %s922
      %vm924 = vcmp.le.f32.partialorder %v871, %v923
      %vm925 = vcmp.le.f32.partialorder %v878, %v923
      %vm926 = vcmp.le.f32.partialorder %v885, %v923
      %vm927 = vcmp.le.f32.partialorder %v892, %v923
      %vm928 = vcmp.le.f32.partialorder %v899, %v923
      %vm929 = vcmp.le.f32.partialorder %v906, %v923
      %vm930 = vcmp.le.f32.partialorder %v913, %v923
      %vm931 = vcmp.le.f32.partialorder %v920, %v923
      %v932 = vsel %vm924, 3.0, 0.0
      %v933 = vsel %vm925, 3.0, 0.0
      %v934 = vsel %vm926, 3.0, 0.0
      %v935 = vsel %vm927, 3.0, 0.0
      %v936 = vsel %vm928, 3.0, 0.0
      %v937 = vsel %vm929, 3.0, 0.0
      %v938 = vsel %vm930, 3.0, 0.0
      %v939 = vsel %vm931, 3.0, 0.0
      %vm948 = vcmask 1041409
      %v949 = vsel %vm948, %v933, %v932
      %vm950 = vcmask 1042434
      %v951 = vsel %vm950, %v934, %v949
      %vm952 = vcmask 1043459
      %v953 = vsel %vm952, %v935, %v951
      %vm954 = vcmask 1044484
      %v955 = vsel %vm954, %v936, %v953
      %vm956 = vcmask 1045509
      %v957 = vsel %vm956, %v937, %v955
      %vm958 = vcmask 1046534
      %v959 = vsel %vm958, %v938, %v957
      %vm960 = vcmask 1047559
      %v961 = vsel %vm960, %v939, %v959
      %963 = vst.msk [vmem:[%s214] sm:$0xff] %vm864, %v961
      %p964 = scmp.lt.s32.totalorder %s20, 1
      %s965 = scalar_select %p964, %s20, 1
      %s966 = smul.addr %s965, 8
      %s967 = scalar_lea.vmem %s5, %s966
      // Predicated region
      $region37: #{tpu_custom_call.1} parent=35 // pred_check
        %p968 = pneg %p132
      $region38: #{tpu_custom_call.1} parent=35 // pred_check_branch
        %970 = sbr.rel (%p968) target = $region40
      $region39: #{tpu_custom_call.1} parent=35 // pred_region
        _
      $region40: #{tpu_custom_call.1} parent=35 // pred_fallthru
        _
    $region36: #{tpu_custom_call.1} parent=5 // pred_fallthru
      _
    %p971 = scmp.le.s32.totalorder 2, %s15
    // Predicated region
    $region41: #{tpu_custom_call.1} parent=5 // pred_check
      %p972 = pneg %p971
    $region42: #{tpu_custom_call.1} parent=5 // pred_check_branch
      %974 = sbr.rel (%p972) target = $region44
    $region43: #{tpu_custom_call.1} parent=5 // pred_region
      %s975 = ssub.s32 %s15, 2
      // Predicated region
      $region45: #{tpu_custom_call.1} parent=43 // pred_check
        %p976 = pneg %p138
      $region46: #{tpu_custom_call.1} parent=43 // pred_check_branch
        %978 = sbr.rel (%p976) target = $region48
      $region47: #{tpu_custom_call.1} parent=43 // pred_region
        %p979 = scmp.lt.s32.totalorder %s21, 1
        %s980 = scalar_select %p979, %s21, 1
        %s981 = smul.addr %s980, 8
        %s982 = scalar_lea.vmem %s5, %s981
      $region48: #{tpu_custom_call.1} parent=43 // pred_fallthru
        _
    $region44: #{tpu_custom_call.1} parent=5 // pred_fallthru
      _
  $region6: #{tpu_custom_call.1} parent=0 // loop_footer
    %s19 = sadd.s32 1, %s15
  $region7: #{tpu_custom_call.1} parent=0 // loop_footer_branch
    %14 = sbr.rel target = $region3
  $region8: #{tpu_custom_call.1} parent=0 // loop_exit
    _

</llo_original>
